<compile_context>
chip_gen: v6e
topology: v6e:2x2x1
jax: 0.10.0
libtpu: 0.0.40
codegen_flags: <defaults>
</compile_context>

<pallas_src>
import jax
import jax.numpy as jnp
from jax.experimental import pallas as pl
from jax.experimental.pallas import tpu as pltpu


def _round_up(n: int, m: int) -> int:
    return ((n + m - 1) // m) * m


# ---------------------------------------------------------------------------
# Pallas kernel: fused (model + baseline) x (policy + value) forward pass
# ---------------------------------------------------------------------------
def _fused_rl_agent_kernel(x_ref, w1_ref, b1_ref, w2_ref, b2_ref, out_ref):
    # x_ref  : (TB, D_IN)    input dtype (cast to bf16 in-kernel)
    # w1_ref : (D_IN, HF_P)  bf16  -- [w1_model | w1_bsln], zero-padded lanes
    # b1_ref : (1, HF_P)     f32   -- packed layer-1 biases (added post-acc)
    # w2_ref : (HF_P, OUT_P) bf16  -- block-diag [[w2m|wvm, 0],[0, w2b|wvb]]
    # b2_ref : (1, OUT_P)    f32   -- packed layer-2 biases
    # out_ref: (TB, OUT_P)   bf16  -- lane-dense packed [lm|vm|lb|vb|pad]
    x = x_ref[...].astype(jnp.bfloat16)

    # Layer 1 for BOTH model and baseline in one wide MXU matmul (f32 acc),
    # bias add + ReLU in f32 (v5e VPU has no bf16 path, and this matches the
    # reference precision: bias is NOT routed through the bf16 MXU).
    h = jnp.dot(x, w1_ref[...], preferred_element_type=jnp.float32)
    h = jnp.maximum(h + b1_ref[...], 0.0)

    # Layer 2: policy + value heads of model AND baseline in one matmul.
    out = jnp.dot(h.astype(jnp.bfloat16), w2_ref[...],
                  preferred_element_type=jnp.float32)
    # f32 bias add, then a single unmasked lane-dense bf16 store.
    out_ref[...] = (out + b2_ref[...]).astype(out_ref.dtype)


# ---------------------------------------------------------------------------
# Host-side parameter packing.  Call ONCE when parameters change (init /
# update_bsln), NOT per forward step.
# ---------------------------------------------------------------------------
def pack_rl_agent_params(model_params, bsln_params, compute_dtype=jnp.bfloat16):
    d_in, hidden = model_params["w1"].shape
    d_out = model_params["w2"].shape[1]

    hf = 2 * hidden                       # fused hidden width (model || bsln)
    hf_p = _round_up(hf, 128)             # lane-align for the MXU
    out_cols = 2 * (d_out + 1)            # [logits_m, v_m, logits_b, v_b]
    out_p = _round_up(out_cols, 128)      # lane-dense output slab width

    # Layer 1: model and baseline weights side by side, zero-pad to hf_p.
    w1 = jnp.concatenate([model_params["w1"], bsln_params["w1"]], axis=1)
    w1 = jnp.pad(w1, ((0, 0), (0, hf_p - hf))).astype(compute_dtype)

    # Layer-1 bias stays f32; added after MXU accumulation inside the kernel.
    b1 = jnp.concatenate([model_params["b1"], bsln_params["b1"]], axis=1)
    b1 = jnp.pad(b1, ((0, 0), (0, hf_p - hf))).astype(jnp.float32)

    # Layer 2: block-diagonal packing of [policy | value] heads.  The strict
    # block separation is what makes stop_gradient on the baseline slices
    # sufficient to keep the baseline halves frozen — keep this invariant.
    w2m = jnp.concatenate([model_params["w2"], model_params["wv"]], axis=1)
    w2b = jnp.concatenate([bsln_params["w2"], bsln_params["wv"]], axis=1)
    w2 = jnp.zeros((hf_p, out_p), jnp.float32)
    w2 = w2.at[:hidden, : d_out + 1].set(w2m)
    w2 = w2.at[hidden:hf, d_out + 1: out_cols].set(w2b)
    w2 = w2.astype(compute_dtype)

    b2 = jnp.zeros((1, out_p), jnp.float32)
    b2 = b2.at[:, : d_out + 1].set(
        jnp.concatenate([model_params["b2"], model_params["bv"]], axis=1))
    b2 = b2.at[:, d_out + 1: out_cols].set(
        jnp.concatenate([bsln_params["b2"], bsln_params["bv"]], axis=1))

    meta = dict(d_in=d_in, hidden=hidden, d_out=d_out, hf_p=hf_p, out_p=out_p)
    return (w1, b1, w2, b2), meta


# ---------------------------------------------------------------------------
# Wrapper: forward(x) -> {"logits", "value", "bsln": {"logits", "value"}}
# ---------------------------------------------------------------------------
def rl_agent_with_baseline_forward(x, packed, meta, *, tile_b=1024,
                                   out_dtype=jnp.bfloat16):
    w1, b1, w2, b2 = packed
    B, d_in = x.shape
    assert d_in == meta["d_in"]
    d_out, hf_p, out_p = meta["d_out"], meta["hf_p"], meta["out_p"]

    # Batch tile: as large as tile_b allows (per-step grid overhead ~0.35 us
    # dominates this tiny-FLOP kernel), but capped at ceil(B/2) so the grid
    # has >= 2 steps whenever possible (v7x megacore batch sharding).
    half = _round_up(pl.cdiv(B, 2), 8)
    tb = max(8, min(_round_up(tile_b, 8), half, _round_up(B, 8)))
    grid = (pl.cdiv(B, tb),)

    out_packed = pl.pallas_call(
        _fused_rl_agent_kernel,
        out_shape=jax.ShapeDtypeStruct((B, out_p), out_dtype),
        grid_spec=pltpu.PrefetchScalarGridSpec(
            num_scalar_prefetch=0,
            grid=grid,
            in_specs=[
                pl.BlockSpec((tb, d_in), lambda i: (i, 0)),    # x: batch-tiled
                pl.BlockSpec((d_in, hf_p), lambda i: (0, 0)),  # weights resident
                pl.BlockSpec((1, hf_p), lambda i: (0, 0)),
                pl.BlockSpec((hf_p, out_p), lambda i: (0, 0)),
                pl.BlockSpec((1, out_p), lambda i: (0, 0)),
            ],
            out_specs=pl.BlockSpec((tb, out_p), lambda i: (i, 0)),
        ),
        compiler_params=pltpu.CompilerParams(
            dimension_semantics=("parallel",),   # shard batch over v7x's 2 TCs
        ),
    )(x, w1, b1, w2, b2)

    # Split the packed output slab back into the four logical outputs.
    logits_m = out_packed[:, :d_out].astype(jnp.float32)
    value_m = out_packed[:, d_out: d_out + 1].astype(jnp.float32)
    # Baseline pass runs under torch.no_grad() in the reference module.
    logits_b = jax.lax.stop_gradient(
        out_packed[:, d_out + 1: 2 * d_out + 1]).astype(jnp.float32)
    value_b = jax.lax.stop_gradient(
        out_packed[:, 2 * d_out + 1: 2 * d_out + 2]).astype(jnp.float32)

    return {
        "logits": logits_m,
        "value": value_m,
        "bsln": {"logits": logits_b, "value": value_b},
    }


# ---------------------------------------------------------------------------
# Deterministic synthetic tour-model params (bsln is a deep copy of model)
# ---------------------------------------------------------------------------
def init_tour_model_params(key, d_in, hidden, d_out):
    k1, k2, k3, k4, k5, k6 = jax.random.split(key, 6)
    s1 = 1.0 / jnp.sqrt(jnp.float32(d_in))
    s2 = 1.0 / jnp.sqrt(jnp.float32(hidden))
    return {
        "w1": jax.random.normal(k1, (d_in, hidden), jnp.float32) * s1,
        "b1": jax.random.normal(k4, (1, hidden), jnp.float32) * 0.1,
        "w2": jax.random.normal(k2, (hidden, d_out), jnp.float32) * s2,
        "b2": jax.random.normal(k5, (1, d_out), jnp.float32) * 0.1,
        "wv": jax.random.normal(k3, (hidden, 1), jnp.float32) * s2,
        "bv": jax.random.normal(k6, (1, 1), jnp.float32) * 0.1,
    }


def _reference_forward(x, p):
    """Pure-JAX reference of one tour-model pass in the kernel's precision
    regime (bf16 matmul operands, f32 accumulation, f32 bias/ReLU)."""
    xb = x.astype(jnp.bfloat16)
    h = jnp.dot(xb, p["w1"].astype(jnp.bfloat16),
                preferred_element_type=jnp.float32) + p["b1"]
    h = jnp.maximum(h, 0.0).astype(jnp.bfloat16)
    logits = jnp.dot(h, p["w2"].astype(jnp.bfloat16),
                     preferred_element_type=jnp.float32) + p["b2"]
    value = jnp.dot(h, p["wv"].astype(jnp.bfloat16),
                    preferred_element_type=jnp.float32) + p["bv"]
    return logits, value


if __name__ == "__main__":
    B, D_IN, HIDDEN, D_OUT = 64, 32, 64, 16

    key = jax.random.PRNGKey(0)
    k_x, k_p = jax.random.split(key)

    x = jax.random.normal(k_x, (B, D_IN), jnp.float32)

    model_params = init_tour_model_params(k_p, D_IN, HIDDEN, D_OUT)
    # self.bsln = copy.deepcopy(model)  -> identical parameter values at init.
    bsln_params = jax.tree_util.tree_map(lambda a: a.copy(), model_params)

    # Pack ONCE (hoisted out of the per-step forward path; redo on update_bsln).
    packed, meta = pack_rl_agent_params(model_params, bsln_params)
    packed = jax.block_until_ready(packed)

    out = rl_agent_with_baseline_forward(x, packed, meta)
    out = jax.block_until_ready(out)

    # Shape checks (match TourModelWithBaselineOutput fields).
    assert out["logits"].shape == (B, D_OUT)
    assert out["value"].shape == (B, 1)
    assert out["bsln"]["logits"].shape == (B, D_OUT)
    assert out["bsln"]["value"].shape == (B, 1)

    # Correctness vs a pure-JAX reference at matching (bf16-operand) precision.
    ref_lm, ref_vm = _reference_forward(x, model_params)
    ref_lb, ref_vb = _reference_forward(x, bsln_params)
    assert jnp.allclose(out["logits"], ref_lm, atol=2e-2, rtol=2e-2)
    assert jnp.allclose(out["value"], ref_vm, atol=2e-2, rtol=2e-2)
    assert jnp.allclose(out["bsln"]["logits"], ref_lb, atol=2e-2, rtol=2e-2)
    assert jnp.allclose(out["bsln"]["value"], ref_vb, atol=2e-2, rtol=2e-2)
    # bsln is a deep copy at init, so its outputs must match the model's.
    assert jnp.allclose(out["logits"], out["bsln"]["logits"], atol=1e-6)
    assert jnp.allclose(out["value"], out["bsln"]["value"], atol=1e-6)

    print("KERNEL_OK")
</pallas_src>

<mosaic_0001>
module attributes {stable_mosaic.version = 11 : i64} {
  func.func @_fused_rl_agent_kernel(%arg0: i32, %arg1: memref<32x32xf32, #tpu.memory_space<vmem>>, %arg2: memref<32x128xbf16, #tpu.memory_space<vmem>>, %arg3: memref<1x128xf32, #tpu.memory_space<vmem>>, %arg4: memref<128x128xbf16, #tpu.memory_space<vmem>>, %arg5: memref<1x128xf32, #tpu.memory_space<vmem>>, %arg6: memref<32x128xbf16, #tpu.memory_space<vmem>>) attributes {dimension_semantics = [#tpu.dimension_semantics<parallel>], iteration_bounds = array<i64: 2>, scalar_prefetch = 0 : i64, scratch_operands = 0 : i64, tpu.core_type = #tpu.core_type<tc>, window_params = [{transform_indices = @transform_0, window_bounds = array<i64: 32, 32>}, {pipeline_mode = #tpu.pipeline_mode<synchronous>, transform_indices = @transform_1, window_bounds = array<i64: 32, 128>}, {pipeline_mode = #tpu.pipeline_mode<synchronous>, transform_indices = @transform_2, window_bounds = array<i64: 1, 128>}, {pipeline_mode = #tpu.pipeline_mode<synchronous>, transform_indices = @transform_3, window_bounds = array<i64: 128, 128>}, {pipeline_mode = #tpu.pipeline_mode<synchronous>, transform_indices = @transform_4, window_bounds = array<i64: 1, 128>}, {transform_indices = @transform_5, window_bounds = array<i64: 32, 128>}]} {
    %c0 = arith.constant 0 : index
    %c0_0 = arith.constant 0 : index
    %0 = vector.load %arg1[%c0, %c0_0] : memref<32x32xf32, #tpu.memory_space<vmem>>, vector<32x32xf32>
    %1 = arith.truncf %0 : vector<32x32xf32> to vector<32x32xbf16>
    %c0_1 = arith.constant 0 : index
    %c0_2 = arith.constant 0 : index
    %2 = vector.load %arg2[%c0_1, %c0_2] : memref<32x128xbf16, #tpu.memory_space<vmem>>, vector<32x128xbf16>
    %cst = arith.constant dense<0.000000e+00> : vector<32x128xf32>
    %3 = tpu.matmul %1, %2, %cst {dimension_numbers = #tpu.dot_dimension_numbers<[1], [0], [0], [1], [0, 0, 1, 1], [], []>} : vector<32x32xbf16>, vector<32x128xbf16>, vector<32x128xf32> -> vector<32x128xf32>
    %c0_3 = arith.constant 0 : index
    %c0_4 = arith.constant 0 : index
    %4 = vector.load %arg3[%c0_3, %c0_4] : memref<1x128xf32, #tpu.memory_space<vmem>>, vector<1x128xf32>
    %5 = vector.broadcast %4 : vector<1x128xf32> to vector<32x128xf32>
    %6 = arith.addf %3, %5 : vector<32x128xf32>
    %cst_5 = arith.constant 0.000000e+00 : f32
    %7 = vector.broadcast %cst_5 : f32 to vector<32x128xf32>
    %8 = arith.maximumf %6, %7 : vector<32x128xf32>
    %9 = arith.truncf %8 : vector<32x128xf32> to vector<32x128xbf16>
    %c0_6 = arith.constant 0 : index
    %c0_7 = arith.constant 0 : index
    %10 = vector.load %arg4[%c0_6, %c0_7] : memref<128x128xbf16, #tpu.memory_space<vmem>>, vector<128x128xbf16>
    %cst_8 = arith.constant dense<0.000000e+00> : vector<32x128xf32>
    %11 = tpu.matmul %9, %10, %cst_8 {dimension_numbers = #tpu.dot_dimension_numbers<[1], [0], [0], [1], [0, 0, 1, 1], [], []>} : vector<32x128xbf16>, vector<128x128xbf16>, vector<32x128xf32> -> vector<32x128xf32>
    %c0_9 = arith.constant 0 : index
    %c0_10 = arith.constant 0 : index
    %12 = vector.load %arg5[%c0_9, %c0_10] : memref<1x128xf32, #tpu.memory_space<vmem>>, vector<1x128xf32>
    %13 = vector.broadcast %12 : vector<1x128xf32> to vector<32x128xf32>
    %14 = arith.addf %11, %13 : vector<32x128xf32>
    %15 = arith.truncf %14 : vector<32x128xf32> to vector<32x128xbf16>
    %c0_11 = arith.constant 0 : index
    %c0_12 = arith.constant 0 : index
    %16 = vector.load %arg6[%c0_11, %c0_12] : memref<32x128xbf16, #tpu.memory_space<vmem>>, vector<32x128xbf16>
    tpu.vector_store %arg6[%c0_11, %c0_12], %15 {strides = array<i32>} : memref<32x128xbf16, #tpu.memory_space<vmem>>, vector<32x128xbf16>,
    return
  }
  func.func @transform_0(%arg0: i32) -> (i32, i32) {
    %c0_i32 = arith.constant 0 : i32
    %c0_i32_0 = arith.constant 0 : i32
    return %arg0, %c0_i32 : i32, i32
  }
  func.func @transform_1(%arg0: i32) -> (i32, i32) {
    %c0_i32 = arith.constant 0 : i32
    %c0_i32_0 = arith.constant 0 : i32
    %c0_i32_1 = arith.constant 0 : i32
    return %c0_i32, %c0_i32_0 : i32, i32
  }
  func.func @transform_2(%arg0: i32) -> (i32, i32) {
    %c0_i32 = arith.constant 0 : i32
    %c0_i32_0 = arith.constant 0 : i32
    %c0_i32_1 = arith.constant 0 : i32
    return %c0_i32, %c0_i32_0 : i32, i32
  }
  func.func @transform_3(%arg0: i32) -> (i32, i32) {
    %c0_i32 = arith.constant 0 : i32
    %c0_i32_0 = arith.constant 0 : i32
    %c0_i32_1 = arith.constant 0 : i32
    return %c0_i32, %c0_i32_0 : i32, i32
  }
  func.func @transform_4(%arg0: i32) -> (i32, i32) {
    %c0_i32 = arith.constant 0 : i32
    %c0_i32_0 = arith.constant 0 : i32
    %c0_i32_1 = arith.constant 0 : i32
    return %c0_i32, %c0_i32_0 : i32, i32
  }
  func.func @transform_5(%arg0: i32) -> (i32, i32) {
    %c0_i32 = arith.constant 0 : i32
    %c0_i32_0 = arith.constant 0 : i32
    return %arg0, %c0_i32 : i32, i32
  }
}

</mosaic_0001>

<llo_original>
// kernel: tpu_custom_call.1
$region0: #{tpu_custom_call.1}
  #allocation0 [shape = 'u32[]', space=smem, size = 0x4, offset = 0x4, fixed_abs, tag = 'smem constant byte address 0x4 - core index']
  #allocation1 [shape = 'u32[144,128]{1,0:T(1,128)}', space=vmem, size = 0x12000, scoped, tag = 'internal scratch']
  %s0 = inlined_call_operand.vmem [shape: f32[64,32], index: 0, kind: input, shape index: {}]
  %s1 = inlined_call_operand.vmem [shape: bf16[32,128], index: 1, kind: input, shape index: {}]
  %s2 = inlined_call_operand.vmem [shape: f32[1,128], index: 2, kind: input, shape index: {}]
  %s3 = inlined_call_operand.vmem [shape: bf16[128,128], index: 3, kind: input, shape index: {}]
  %s4 = inlined_call_operand.vmem [shape: f32[1,128], index: 4, kind: input, shape index: {}]
  %s5 = inlined_call_operand.hbm [shape: bf16[64,128], index: 5, kind: output, shape index: {}]
  %s6 = sld [smem:[#allocation0]]
  $region53: #{tpu_custom_call.1} parent=0
    _
  %s8 = ssub.s32 1, %s6
  %s9 = scalar_select 0, %s8, %s6
  $region1: #{tpu_custom_call.1} parent=0
    #allocation2 [shape = 'u8[16384]{0}', space=vmem, size = 0x4000, scoped, tag = 'output window, operand 0']
    #allocation3 [shape = 's32[2]{0}', space=sflag, size = 0x8, scoped, tag = 'scoped memory for tpu_custom_call.1']
    %10 = vsyncpa [#allocation3], 0
    %s11 = scalar_lea.sflag [#allocation3], 1
    %12 = vsyncpa %s11, 0
    loop: start=0, step=1, limit=4
    $region2: #{tpu_custom_call.1} parent=1 // loop_pre_header
      _
    $region3: #{tpu_custom_call.1} parent=1 // loop_header
      %s14 = sphi 0, %s18
      %p15 = scmp.ge.s32.totalorder %s14, 4
      %s24 = sphi 0, %s26
      %s27 = sphi 0, %s24
      %s28 = sphi 0, %s27
      %s44 = sphi 0, %s28
      %s48 = sphi 0, %s48
      %s50 = sphi 0, %s48
      %s51 = sphi 0, %s50
      %s65 = sphi 0, %s51
      %s69 = sphi 0, %s69
      %s71 = sphi 0, %s69
      %s72 = sphi 0, %s71
      %s86 = sphi 0, %s72
      %s90 = sphi 0, %s90
      %s92 = sphi 0, %s90
      %s93 = sphi 0, %s92
      %s107 = sphi 0, %s93
      %s111 = sphi 0, %s111
      %s113 = sphi 0, %s111
      %s114 = sphi 0, %s113
      %s128 = sphi 0, %s114
      %s134 = sphi 0, %s136
      %s137 = sphi 0, %s134
      %s138 = sphi 0, %s137
      %s154 = sphi 0, %s138
    $region4: #{tpu_custom_call.1} parent=1 // loop_header_branch
      %17 = sbr.rel (%p15) target = $region8
    $region5: #{tpu_custom_call.1} parent=1 // loop_body
      %s19 = ssub.s32 %s14, 1
      %s20 = ssub.s32 %s14, 2
      %s21 = sadd.s32 %s14, 1
      %s22 = ssub.s32 %s14, %s21
      %p23 = scmp.eq.s32.totalorder %s22, 0
      %s25 = sadd.s32 %s24, 1
      %s26 = scalar_select %p23, %s24, %s25
      %p29 = pneg %p23
      %p30 = scmp.eq.s32.totalorder %s14, 1
      %p31 = por %p29, %p30
      %p32 = scmp.ne.s32.totalorder %s24, %s27
      %p33 = scmp.eq.s32.totalorder %s14, 0
      %p34 = por %p32, %p33
      %p35 = scmp.ne.s32.totalorder %s24, %s27
      %p36 = scmp.eq.s32.totalorder %s19, 1
      %p37 = por %p35, %p36
      %p38 = scmp.ne.s32.totalorder %s27, %s28
      %p39 = scmp.eq.s32.totalorder %s19, 0
      %p40 = por %p38, %p39
      %p41 = scmp.ne.s32.totalorder %s27, %s28
      %p42 = scmp.eq.s32.totalorder %s20, 1
      %p43 = por %p41, %p42
      %p45 = scmp.ne.s32.totalorder %s28, %s44
      %p46 = scmp.eq.s32.totalorder %s20, 0
      %p47 = por %p45, %p46
      %s49 = sadd.s32 %s48, 1
      %p52 = scmp.eq.s32.totalorder %s14, 1
      %p53 = scmp.ne.s32.totalorder %s48, %s50
      %p54 = scmp.eq.s32.totalorder %s14, 0
      %p55 = por %p53, %p54
      %p56 = scmp.ne.s32.totalorder %s48, %s50
      %p57 = scmp.eq.s32.totalorder %s19, 1
      %p58 = por %p56, %p57
      %p59 = scmp.ne.s32.totalorder %s50, %s51
      %p60 = scmp.eq.s32.totalorder %s19, 0
      %p61 = por %p59, %p60
      %p62 = scmp.ne.s32.totalorder %s50, %s51
      %p63 = scmp.eq.s32.totalorder %s20, 1
      %p64 = por %p62, %p63
      %p66 = scmp.ne.s32.totalorder %s51, %s65
      %p67 = scmp.eq.s32.totalorder %s20, 0
      %p68 = por %p66, %p67
      %s70 = sadd.s32 %s69, 1
      %p73 = scmp.eq.s32.totalorder %s14, 1
      %p74 = scmp.ne.s32.totalorder %s69, %s71
      %p75 = scmp.eq.s32.totalorder %s14, 0
      %p76 = por %p74, %p75
      %p77 = scmp.ne.s32.totalorder %s69, %s71
      %p78 = scmp.eq.s32.totalorder %s19, 1
      %p79 = por %p77, %p78
      %p80 = scmp.ne.s32.totalorder %s71, %s72
      %p81 = scmp.eq.s32.totalorder %s19, 0
      %p82 = por %p80, %p81
      %p83 = scmp.ne.s32.totalorder %s71, %s72
      %p84 = scmp.eq.s32.totalorder %s20, 1
      %p85 = por %p83, %p84
      %p87 = scmp.ne.s32.totalorder %s72, %s86
      %p88 = scmp.eq.s32.totalorder %s20, 0
      %p89 = por %p87, %p88
      %s91 = sadd.s32 %s90, 1
      %p94 = scmp.eq.s32.totalorder %s14, 1
      %p95 = scmp.ne.s32.totalorder %s90, %s92
      %p96 = scmp.eq.s32.totalorder %s14, 0
      %p97 = por %p95, %p96
      %p98 = scmp.ne.s32.totalorder %s90, %s92
      %p99 = scmp.eq.s32.totalorder %s19, 1
      %p100 = por %p98, %p99
      %p101 = scmp.ne.s32.totalorder %s92, %s93
      %p102 = scmp.eq.s32.totalorder %s19, 0
      %p103 = por %p101, %p102
      %p104 = scmp.ne.s32.totalorder %s92, %s93
      %p105 = scmp.eq.s32.totalorder %s20, 1
      %p106 = por %p104, %p105
      %p108 = scmp.ne.s32.totalorder %s93, %s107
      %p109 = scmp.eq.s32.totalorder %s20, 0
      %p110 = por %p108, %p109
      %s112 = sadd.s32 %s111, 1
      %p115 = scmp.eq.s32.totalorder %s14, 1
      %p116 = scmp.ne.s32.totalorder %s111, %s113
      %p117 = scmp.eq.s32.totalorder %s14, 0
      %p118 = por %p116, %p117
      %p119 = scmp.ne.s32.totalorder %s111, %s113
      %p120 = scmp.eq.s32.totalorder %s19, 1
      %p121 = por %p119, %p120
      %p122 = scmp.ne.s32.totalorder %s113, %s114
      %p123 = scmp.eq.s32.totalorder %s19, 0
      %p124 = por %p122, %p123
      %p125 = scmp.ne.s32.totalorder %s113, %s114
      %p126 = scmp.eq.s32.totalorder %s20, 1
      %p127 = por %p125, %p126
      %p129 = scmp.ne.s32.totalorder %s114, %s128
      %p130 = scmp.eq.s32.totalorder %s20, 0
      %p131 = por %p129, %p130
      %s132 = ssub.s32 %s14, %s21
      %p133 = scmp.eq.s32.totalorder %s132, 0
      %s135 = sadd.s32 %s134, 1
      %s136 = scalar_select %p133, %s134, %s135
      %p139 = pneg %p133
      %p140 = scmp.eq.s32.totalorder %s14, 1
      %p141 = por %p139, %p140
      %p142 = scmp.ne.s32.totalorder %s134, %s137
      %p143 = scmp.eq.s32.totalorder %s14, 0
      %p144 = por %p142, %p143
      %p145 = scmp.ne.s32.totalorder %s134, %s137
      %p146 = scmp.eq.s32.totalorder %s19, 1
      %p147 = por %p145, %p146
      %p148 = scmp.ne.s32.totalorder %s137, %s138
      %p149 = scmp.eq.s32.totalorder %s19, 0
      %p150 = por %p148, %p149
      %p151 = scmp.ne.s32.totalorder %s137, %s138
      %p152 = scmp.eq.s32.totalorder %s20, 1
      %p153 = por %p151, %p152
      %p155 = scmp.ne.s32.totalorder %s138, %s154
      %p156 = scmp.eq.s32.totalorder %s20, 0
      %p157 = por %p155, %p156
      %p158 = scmp.le.s32.totalorder 1, %s14
      %p159 = scmp.lt.s32.totalorder %s14, 3
      %p160 = pnand %p158, %p159
      %p161 = pneg %p160
      // Predicated region
      $region9: #{tpu_custom_call.1} parent=5 // pred_check
        _
      $region10: #{tpu_custom_call.1} parent=5 // pred_check_branch
        %163 = sbr.rel (%p160) target = $region12
      $region11: #{tpu_custom_call.1} parent=5 // pred_region
        %s164 = ssub.s32 %s14, 1
        // Predicated region
        $region13: #{tpu_custom_call.1} parent=11 // pred_check
          %p165 = pneg %p61
        $region14: #{tpu_custom_call.1} parent=11 // pred_check_branch
          %167 = sbr.rel (%p165) target = $region16
        $region15: #{tpu_custom_call.1} parent=11 // pred_region
          _
        $region16: #{tpu_custom_call.1} parent=11 // pred_fallthru
          _
        // Predicated region
        $region17: #{tpu_custom_call.1} parent=11 // pred_check
          %p168 = pneg %p82
        $region18: #{tpu_custom_call.1} parent=11 // pred_check_branch
          %170 = sbr.rel (%p168) target = $region20
        $region19: #{tpu_custom_call.1} parent=11 // pred_region
          _
        $region20: #{tpu_custom_call.1} parent=11 // pred_fallthru
          _
        // Predicated region
        $region21: #{tpu_custom_call.1} parent=11 // pred_check
          %p171 = pneg %p103
        $region22: #{tpu_custom_call.1} parent=11 // pred_check_branch
          %173 = sbr.rel (%p171) target = $region24
        $region23: #{tpu_custom_call.1} parent=11 // pred_region
          _
        $region24: #{tpu_custom_call.1} parent=11 // pred_fallthru
          _
        // Predicated region
        $region25: #{tpu_custom_call.1} parent=11 // pred_check
          %p174 = pneg %p124
        $region26: #{tpu_custom_call.1} parent=11 // pred_check_branch
          %176 = sbr.rel (%p174) target = $region28
        $region27: #{tpu_custom_call.1} parent=11 // pred_region
          _
        $region28: #{tpu_custom_call.1} parent=11 // pred_fallthru
          _
      $region12: #{tpu_custom_call.1} parent=5 // pred_fallthru
        _
      %p177 = scmp.lt.s32.totalorder %s14, 2
      // Predicated region
      $region29: #{tpu_custom_call.1} parent=5 // pred_check
        %p178 = pneg %p177
      $region30: #{tpu_custom_call.1} parent=5 // pred_check_branch
        %180 = sbr.rel (%p178) target = $region32
      $region31: #{tpu_custom_call.1} parent=5 // pred_region
        // Predicated region
        $region33: #{tpu_custom_call.1} parent=31 // pred_check
          %p181 = pneg %p34
        $region34: #{tpu_custom_call.1} parent=31 // pred_check_branch
          %183 = sbr.rel (%p181) target = $region36
        $region35: #{tpu_custom_call.1} parent=31 // pred_region
          %s184 = smul.u32 4, %s14
          %p185 = scmp.lt.s32.totalorder %s184, 7
          %s186 = scalar_select %p185, %s184, 7
          %s187 = smul.addr %s186, 8
          %s188 = scalar_lea.vmem %s0, %s187
          %s189 = smul.u32 4, %s14
        $region36: #{tpu_custom_call.1} parent=31 // pred_fallthru
          _
      $region32: #{tpu_custom_call.1} parent=5 // pred_fallthru
        _
      %p190 = scmp.le.s32.totalorder 1, %s14
      %p191 = scmp.lt.s32.totalorder %s14, 3
      %p192 = pnand %p190, %p191
      %p193 = pneg %p192
      // Predicated region
      $region37: #{tpu_custom_call.1} parent=5 // pred_check
        _
      $region38: #{tpu_custom_call.1} parent=5 // pred_check_branch
        %195 = sbr.rel (%p192) target = $region40
      $region39: #{tpu_custom_call.1} parent=5 // pred_region
        %s196 = ssub.s32 %s14, 1
        %s197 = smul.u32 4, %s19
        %p198 = scmp.lt.s32.totalorder %s197, 7
        %s199 = scalar_select %p198, %s197, 7
        %s200 = smul.addr %s199, 8
        %s201 = scalar_lea.vmem %s0, %s200
        %p202 = pneg %p40
        %p203 = pneg %p37
        %p204 = pneg %p61
        %p205 = pneg %p58
        %p206 = pneg %p82
        %p207 = pneg %p79
        %p208 = pneg %p103
        %p209 = pneg %p100
        %p210 = pneg %p124
        %p211 = pneg %p121
        %p212 = pneg %p150
        %p213 = pneg %p147
        %s214 = sand.u32 %s137, 1
        %s215 = scalar_lea.sflag [#allocation3], %s214
        %s216 = sand.u32 %s137, 1
        %s217 = smul.addr %s216, 16
        %s218 = scalar_lea.vmem [#allocation2], %s217
        %s219 = smul.u32 4, %s19
        %p220 = scmp.lt.s32.totalorder %s219, 7
        %s221 = scalar_select %p220, %s219, 7
        %s222 = smul.addr %s221, 8
        %s223 = scalar_lea.vmem %s0, %s222
        %s224 = smul.u32 4, %s19
        %s225 = smul.u32 4, %s19
        %v227 = vld [vmem:[%s223] sm:$0xff]
        %v228 = vld [vmem:[%s223 + $0x8] sm:$0xff]
        %v229 = vld [vmem:[%s223 + $0x10] sm:$0xff]
        %v230 = vld [vmem:[%s223 + $0x18] sm:$0xff]
        %v231 = vpack.c.bf16 %v228, %v227
        %v232 = vpack.c.bf16 %v230, %v229
        %v233 = vld [vmem:[%s1] sm:$0xf]
        %v234 = vld [vmem:[%s1 + $0x4] sm:$0xf]
        %v235 = vld [vmem:[%s1 + $0x8] sm:$0xf]
        %v236 = vld [vmem:[%s1 + $0xc] sm:$0xf]
        %v237 = vld [vmem:[%s2] sm:$0x1]
        %v239 = vlaneseq
        %v240 = vshrl.u32 %v239, 7
        %v241 = vsub.s32 0, %v240
        %v242 = vrot.slane %v237, %v241
        %v248 = vunpack.c.l.b16 %v233
        %v249 = vunpack.c.l.b16 %v234
        %v250 = vunpack.c.l.b16 %v235
        %v251 = vunpack.c.l.b16 %v236
        %v252 = vpack.c.b16 %v249, %v248
        %v253 = vpack.c.b16 %v251, %v250
        %vm256 = vcmask 261120
        %v258 = vsel %vm256, %v231, 0
        %v261 = vsel %vm256, %v232, 0
        %263 = vmatprep.subr.bf16.mxu0 0
        %264 = vmatpush1.bf16.msra.mxu0 0
        %265 = vmatprep.subr.bf16.mxu0 0
        %266 = vmatpush1.bf16.msra.mxu0 0
        %267 = vmatprep.subr.bf16.mxu0 0
        %268 = vmatpush1.bf16.msra.mxu0 0
        %269 = vmatprep.subr.bf16.mxu0 0
        %270 = vmatpush1.bf16.msra.mxu0 0
        %271 = vmatprep.subr.bf16.mxu0 0
        %272 = vmatpush1.bf16.msra.mxu0 0
        %273 = vmatprep.subr.bf16.mxu0 0
        %274 = vmatpush1.bf16.msra.mxu0 0
        %275 = vmatprep.subr.bf16.mxu0 0
        %276 = vmatpush1.bf16.msra.mxu0 %v253
        %277 = vmatprep.subr.bf16.mxu0 0
        %278 = vmatpush1.bf16.msra.mxu0 %v252
        %279 = vmatprep.subr.bf16.mxu0 0
        %280 = vmatpush2.bf16.msra.mxu0 0
        %281 = vmatprep.subr.bf16.mxu0 0
        %282 = vmatpush2.bf16.msra.mxu0 0
        %283 = vmatprep.subr.bf16.mxu0 0
        %284 = vmatpush2.bf16.msra.mxu0 0
        %285 = vmatprep.subr.bf16.mxu0 0
        %286 = vmatpush2.bf16.msra.mxu0 0
        %287 = vmatprep.subr.bf16.mxu0 0
        %288 = vmatpush2.bf16.msra.mxu0 0
        %289 = vmatprep.subr.bf16.mxu0 0
        %290 = vmatpush2.bf16.msra.mxu0 0
        %291 = vmatprep.subr.bf16.mxu0 0
        %292 = vmatpush2.bf16.msra.mxu0 0
        %293 = vmatprep.subr.bf16.mxu0 0
        %294 = vmatpush2.bf16.msra.mxu0 0
        %295 = vmatprep.mubr.bf16.mxu0 0
        %296 = vmatmul.mubr.bf16.gmra.mxu0 %v258
        %v297 = vpop.f32.mrf.mxu0
        %v298 = vadd.f32 %v242, %v297
        %v299 = vpop.f32.mrf.mxu0
        %v300 = vpop.f32.mrf.mxu0
        %v301 = vadd.f32 %v242, %v300
        %v302 = vpop.f32.mrf.mxu0
        %303 = vmatprep.mubr.bf16.mxu0 0
        %304 = vmatmul.mubr.bf16.gmra.mxu0 %v261
        %v305 = vpop.f32.mrf.mxu0
        %v306 = vadd.f32 %v242, %v305
        %v307 = vpop.f32.mrf.mxu0
        %v308 = vpop.f32.mrf.mxu0
        %v309 = vadd.f32 %v242, %v308
        %v310 = vpop.f32.mrf.mxu0
        %311 = vdwg.mxu0
        %v312 = vmax.f32 %v298, 0.0
        %v313 = vmax.f32 %v301, 0.0
        %v314 = vmax.f32 %v306, 0.0
        %v315 = vmax.f32 %v309, 0.0
        %v316 = vpack.c.bf16 %v313, %v312
        %v317 = vpack.c.bf16 %v315, %v314
        %v318 = vld [vmem:[%s3] sm:$0xf]
        %v319 = vld [vmem:[%s3 + $0x4] sm:$0xf]
        %v320 = vld [vmem:[%s3 + $0x8] sm:$0xf]
        %v321 = vld [vmem:[%s3 + $0xc] sm:$0xf]
        %v322 = vld [vmem:[%s3 + $0x10] sm:$0xf]
        %v323 = vld [vmem:[%s3 + $0x14] sm:$0xf]
        %v324 = vld [vmem:[%s3 + $0x18] sm:$0xf]
        %v325 = vld [vmem:[%s3 + $0x1c] sm:$0xf]
        %v326 = vld [vmem:[%s3 + $0x20] sm:$0xf]
        %v327 = vld [vmem:[%s3 + $0x24] sm:$0xf]
        %v328 = vld [vmem:[%s3 + $0x28] sm:$0xf]
        %v329 = vld [vmem:[%s3 + $0x2c] sm:$0xf]
        %v330 = vld [vmem:[%s3 + $0x30] sm:$0xf]
        %v331 = vld [vmem:[%s3 + $0x34] sm:$0xf]
        %v332 = vld [vmem:[%s3 + $0x38] sm:$0xf]
        %v333 = vld [vmem:[%s3 + $0x3c] sm:$0xf]
        %v334 = vld [vmem:[%s4] sm:$0x1]
        %v336 = vlaneseq
        %v337 = vshrl.u32 %v336, 7
        %v338 = vsub.s32 0, %v337
        %v339 = vrot.slane %v334, %v338
        %v357 = vunpack.c.l.b16 %v318
        %v358 = vunpack.c.l.b16 %v319
        %v359 = vunpack.c.l.b16 %v320
        %v360 = vunpack.c.l.b16 %v321
        %v361 = vunpack.c.l.b16 %v322
        %v362 = vunpack.c.l.b16 %v323
        %v363 = vunpack.c.l.b16 %v324
        %v364 = vunpack.c.l.b16 %v325
        %v365 = vunpack.c.l.b16 %v326
        %v366 = vunpack.c.l.b16 %v327
        %v367 = vunpack.c.l.b16 %v328
        %v368 = vunpack.c.l.b16 %v329
        %v369 = vunpack.c.l.b16 %v330
        %v370 = vunpack.c.l.b16 %v331
        %v371 = vunpack.c.l.b16 %v332
        %v372 = vunpack.c.l.b16 %v333
        %v373 = vpack.c.b16 %v358, %v357
        %v374 = vpack.c.b16 %v360, %v359
        %v375 = vpack.c.b16 %v362, %v361
        %v376 = vpack.c.b16 %v364, %v363
        %v377 = vpack.c.b16 %v366, %v365
        %v378 = vpack.c.b16 %v368, %v367
        %v379 = vpack.c.b16 %v370, %v369
        %v380 = vpack.c.b16 %v372, %v371
        %389 = vmatprep.subr.bf16.mxu0 0
        %390 = vmatpush1.bf16.msra.mxu0 %v380
        %391 = vmatprep.subr.bf16.mxu0 0
        %392 = vmatpush1.bf16.msra.mxu0 %v379
        %393 = vmatprep.subr.bf16.mxu0 0
        %394 = vmatpush1.bf16.msra.mxu0 %v378
        %395 = vmatprep.subr.bf16.mxu0 0
        %396 = vmatpush1.bf16.msra.mxu0 %v377
        %397 = vmatprep.subr.bf16.mxu0 0
        %398 = vmatpush1.bf16.msra.mxu0 %v376
        %399 = vmatprep.subr.bf16.mxu0 0
        %400 = vmatpush1.bf16.msra.mxu0 %v375
        %401 = vmatprep.subr.bf16.mxu0 0
        %402 = vmatpush1.bf16.msra.mxu0 %v374
        %403 = vmatprep.subr.bf16.mxu0 0
        %404 = vmatpush1.bf16.msra.mxu0 %v373
        %405 = vmatprep.subr.bf16.mxu0 0
        %406 = vmatpush2.bf16.msra.mxu0 0
        %407 = vmatprep.subr.bf16.mxu0 0
        %408 = vmatpush2.bf16.msra.mxu0 0
        %409 = vmatprep.subr.bf16.mxu0 0
        %410 = vmatpush2.bf16.msra.mxu0 0
        %411 = vmatprep.subr.bf16.mxu0 0
        %412 = vmatpush2.bf16.msra.mxu0 0
        %413 = vmatprep.subr.bf16.mxu0 0
        %414 = vmatpush2.bf16.msra.mxu0 0
        %415 = vmatprep.subr.bf16.mxu0 0
        %416 = vmatpush2.bf16.msra.mxu0 0
        %417 = vmatprep.subr.bf16.mxu0 0
        %418 = vmatpush2.bf16.msra.mxu0 0
        %419 = vmatprep.subr.bf16.mxu0 0
        %420 = vmatpush2.bf16.msra.mxu0 0
        %421 = vmatprep.mubr.bf16.mxu0 0
        %422 = vmatmul.mubr.bf16.gmra.mxu0 %v316
        %v423 = vpop.f32.mrf.mxu0
        %v424 = vadd.f32 %v339, %v423
        %v425 = vpop.f32.mrf.mxu0
        %v426 = vpop.f32.mrf.mxu0
        %v427 = vadd.f32 %v339, %v426
        %v428 = vpop.f32.mrf.mxu0
        %429 = vmatprep.mubr.bf16.mxu0 0
        %430 = vmatmul.mubr.bf16.gmra.mxu0 %v317
        %v431 = vpop.f32.mrf.mxu0
        %v432 = vadd.f32 %v339, %v431
        %v433 = vpop.f32.mrf.mxu0
        %v434 = vpop.f32.mrf.mxu0
        %v435 = vadd.f32 %v339, %v434
        %v436 = vpop.f32.mrf.mxu0
        %437 = vdwg.mxu0
        %v438 = vpack.c.bf16 %v427, %v424
        %v439 = vpack.c.bf16 %v435, %v432
        %v442 = vunpack.c.l.b16 %v438
        %v443 = vunpack.c.h.b16 %v438
        %v444 = vunpack.c.l.b16 %v439
        %v445 = vunpack.c.h.b16 %v439
        %v446 = vpack.c.b16 %v442, %v442
        %v447 = vpack.c.b16 %v443, %v443
        %v448 = vpack.c.b16 %v444, %v444
        %v449 = vpack.c.b16 %v445, %v445
        %454 = vst [vmem:[%s218] sm:$0xf] %v446
        %455 = vst [vmem:[%s218 + $0x4] sm:$0xf] %v447
        %456 = vst [vmem:[%s218 + $0x8] sm:$0xf] %v448
        %457 = vst [vmem:[%s218 + $0xc] sm:$0xf] %v449
        %s458 = sand.u32 %s137, 1
        %s459 = scalar_lea.sflag [#allocation3], %s458
        %s460 = sand.u32 %s137, 1
        %s461 = smul.addr %s460, 16
        %s462 = scalar_lea.vmem [#allocation2], %s461
        // Predicated region
        $region41: #{tpu_custom_call.1} parent=39 // pred_check
          %p463 = pneg %p147
        $region42: #{tpu_custom_call.1} parent=39 // pred_check_branch
          %465 = sbr.rel (%p463) target = $region44
        $region43: #{tpu_custom_call.1} parent=39 // pred_region
          %s466 = smul.u32 4, %s19
          %s468 = ssub.s32 256, 256
          %469 = vsyncadd %s459, %s468
          %s470 = smul.addr %s466, 64
          %s471 = scalar_lea.hbm %s5, %s470
          %s472 = sshll.u32 %s462, 4
          %s473 = int_to_ptr.vmem [resolvable:$true] %s472
          %478 = dma.vmem_to_hbm [thread:$0]  %s473, 256, %s471, %s459, 64, 64, 4
        $region44: #{tpu_custom_call.1} parent=39 // pred_fallthru
          _
      $region40: #{tpu_custom_call.1} parent=5 // pred_fallthru
        _
      %p479 = scmp.le.s32.totalorder 2, %s14
      // Predicated region
      $region45: #{tpu_custom_call.1} parent=5 // pred_check
        %p480 = pneg %p479
      $region46: #{tpu_custom_call.1} parent=5 // pred_check_branch
        %482 = sbr.rel (%p480) target = $region48
      $region47: #{tpu_custom_call.1} parent=5 // pred_region
        %s483 = ssub.s32 %s14, 2
        // Predicated region
        $region49: #{tpu_custom_call.1} parent=47 // pred_check
          %p484 = pneg %p153
        $region50: #{tpu_custom_call.1} parent=47 // pred_check_branch
          %486 = sbr.rel (%p484) target = $region52
        $region51: #{tpu_custom_call.1} parent=47 // pred_region
          %s487 = sand.u32 %s138, 1
          %s488 = scalar_lea.sflag [#allocation3], %s487
          %s489 = sand.u32 %s138, 1
          %s490 = smul.addr %s489, 16
          %s491 = scalar_lea.vmem [#allocation2], %s490
          %492 = dma.done %s488, 256
        $region52: #{tpu_custom_call.1} parent=47 // pred_fallthru
          _
      $region48: #{tpu_custom_call.1} parent=5 // pred_fallthru
        _
    $region6: #{tpu_custom_call.1} parent=1 // loop_footer
      %s18 = sadd.s32 1, %s14
    $region7: #{tpu_custom_call.1} parent=1 // loop_footer_branch
      %13 = sbr.rel target = $region3
    $region8: #{tpu_custom_call.1} parent=1 // loop_exit
      _
    %493 = vsyncpa [#allocation3], 1
    %s494 = scalar_lea.sflag [#allocation3], 1
    %495 = vsyncpa %s494, 1

</llo_original>
